<compile_context>
chip_gen: v6e
topology: v6e:2x2x1
jax: 0.10.0
libtpu: 0.0.40
codegen_flags: <defaults>
</compile_context>

<pallas_src>
import functools

import jax
import jax.numpy as jnp
from jax.experimental import pallas as pl
from jax.experimental.pallas import tpu as pltpu


def _round_up(a, b):
    return ((a + b - 1) // b) * b


def _gin_agg_kernel(idx_ref, x_ref, w1t_ref, b1_ref, w2t_ref, b2_ref,
                    out_ref, acc_ref):
    k = pl.program_id(0)

    @pl.when(k == 0)
    def _init():
        acc_ref[...] = jnp.zeros_like(acc_ref)

    Sp = acc_ref.shape[0]
    TN = x_ref.shape[0]

    # Scatter-sum for this node tile via one-hot matmul:
    #   onehot[s, n] = (index[n] == s); padded indices are >= Sp -> all-zero row.
    ids = idx_ref[...]                                          # (1, TN) int32
    rows = jax.lax.broadcasted_iota(jnp.int32, (Sp, TN), 0)     # (Sp, TN)
    onehot = (rows == ids).astype(x_ref.dtype)                  # exact 0/1
    acc_ref[...] += jnp.dot(onehot, x_ref[...],
                            preferred_element_type=jnp.float32)  # (Sp, Hp) f32

    @pl.when(k == pl.num_programs(0) - 1)
    def _finalize():
        # MLP epilogue: Linear -> ReLU -> Linear with pre-transposed weights.
        agg = acc_ref[...].astype(w1t_ref.dtype)
        h = jnp.dot(agg, w1t_ref[...], preferred_element_type=jnp.float32)
        h = jnp.maximum(h + b1_ref[...], 0.0)
        y = jnp.dot(h.astype(w2t_ref.dtype), w2t_ref[...],
                    preferred_element_type=jnp.float32)
        y = y + b2_ref[...]
        out_ref[...] = y.astype(out_ref.dtype)


@functools.partial(jax.jit, static_argnames=("num_segments",))
def gin_agg(x, index, w1, b1, w2, b2, *, num_segments):
    N, H = x.shape
    S = num_segments
    out_dtype = x.dtype

    # Lane-dense feature dim, sublane-aligned segment dim, tiled node dim.
    Hp = _round_up(max(H, 128), 128)
    Sp = _round_up(max(S, 8), 8)
    TN = min(512, _round_up(N, 128))          # contraction tile (multiple of 128)
    Np = _round_up(N, TN)
    num_tiles = Np // TN

    # Zero-pad x (padded rows are killed by the one-hot), pad index with Sp
    # (outside [0, Sp) so padded rows never hit the accumulator).
    x_p = jnp.zeros((Np, Hp), x.dtype).at[:N, :H].set(x)
    idx_p = jnp.full((1, Np), Sp, jnp.int32).at[0, :N].set(index.astype(jnp.int32))

    # Pre-transposed weights: (in, out) contiguous layout, zero-padded.
    w1t = jnp.zeros((Hp, Hp), w1.dtype).at[:H, :H].set(w1.T)
    w2t = jnp.zeros((Hp, Hp), w2.dtype).at[:H, :H].set(w2.T)
    b1p = jnp.zeros((1, Hp), b1.dtype).at[0, :H].set(b1)
    b2p = jnp.zeros((1, Hp), b2.dtype).at[0, :H].set(b2)

    out_p = pl.pallas_call(
        _gin_agg_kernel,
        out_shape=jax.ShapeDtypeStruct((Sp, Hp), out_dtype),
        grid_spec=pltpu.PrefetchScalarGridSpec(
            num_scalar_prefetch=0,
            grid=(num_tiles,),
            in_specs=[
                pl.BlockSpec((1, TN), lambda k: (0, k)),    # index tile
                pl.BlockSpec((TN, Hp), lambda k: (k, 0)),   # x tile (streamed)
                pl.BlockSpec((Hp, Hp), lambda k: (0, 0)),   # w1^T (resident)
                pl.BlockSpec((1, Hp), lambda k: (0, 0)),    # b1
                pl.BlockSpec((Hp, Hp), lambda k: (0, 0)),   # w2^T (resident)
                pl.BlockSpec((1, Hp), lambda k: (0, 0)),    # b2
            ],
            out_specs=pl.BlockSpec((Sp, Hp), lambda k: (0, 0)),
            scratch_shapes=[pltpu.VMEM((Sp, Hp), jnp.float32)],
        ),
        compiler_params=pltpu.CompilerParams(
            dimension_semantics=("arbitrary",),      # N is a reduction axis
            vmem_limit_bytes=32 * 1024 * 1024,
        ),
    )(idx_p, x_p, w1t, b1p, w2t, b2p)

    return out_p[:S, :H]
    # TODO(synk): for many small graphs, add a leading "parallel" grid axis over
    # graphs (batching) so v7x can shard across its 2 TensorCores.


def _xavier_uniform(key, shape, dtype=jnp.float32):
    fan_out, fan_in = shape
    bound = (6.0 / (fan_in + fan_out)) ** 0.5
    return jax.random.uniform(key, shape, dtype, minval=-bound, maxval=bound)


def _reference(x, index, w1, b1, w2, b2, num_segments):
    agg = jax.ops.segment_sum(x, index, num_segments=num_segments)
    h = jnp.maximum(agg @ w1.T + b1, 0.0)
    return h @ w2.T + b2


if __name__ == "__main__":
    # Small shapes: N=16 nodes, H=32 hidden, S=8 segments.
    N, H, S = 16, 32, 8

    key = jax.random.PRNGKey(0)
    kx, kidx, kw1, kb1, kw2, kb2 = jax.random.split(key, 6)

    x = jax.random.normal(kx, (N, H), jnp.float32)
    index = jax.random.randint(kidx, (N,), 0, S, jnp.int32)

    # nn.Linear(H, H): weight (out_features, in_features) xavier-uniform,
    # bias uniform(-1/sqrt(fan_in), 1/sqrt(fan_in)).
    w1 = _xavier_uniform(kw1, (H, H))
    w2 = _xavier_uniform(kw2, (H, H))
    bb = 1.0 / (H ** 0.5)
    b1 = jax.random.uniform(kb1, (H,), jnp.float32, minval=-bb, maxval=bb)
    b2 = jax.random.uniform(kb2, (H,), jnp.float32, minval=-bb, maxval=bb)

    out = gin_agg(x, index, w1, b1, w2, b2, num_segments=S)
    out = jax.block_until_ready(out)

    ref = _reference(x, index, w1, b1, w2, b2, S)
    assert out.shape == (S, H)
    assert jnp.allclose(out, ref, atol=1e-4, rtol=1e-4), "mismatch vs reference"

    print("KERNEL_OK")
</pallas_src>

<mosaic_0001>
module attributes {stable_mosaic.version = 11 : i64} {
  func.func @_gin_agg_kernel(%arg0: i32, %arg1: memref<1x128xi32, #tpu.memory_space<vmem>>, %arg2: memref<128x128xf32, #tpu.memory_space<vmem>>, %arg3: memref<128x128xf32, #tpu.memory_space<vmem>>, %arg4: memref<1x128xf32, #tpu.memory_space<vmem>>, %arg5: memref<128x128xf32, #tpu.memory_space<vmem>>, %arg6: memref<1x128xf32, #tpu.memory_space<vmem>>, %arg7: memref<8x128xf32, #tpu.memory_space<vmem>>, %arg8: memref<8x128xf32, #tpu.memory_space<vmem>>) attributes {dimension_semantics = [#tpu.dimension_semantics<arbitrary>], iteration_bounds = array<i64: 1>, scalar_prefetch = 0 : i64, scratch_operands = 1 : i64, tpu.core_type = #tpu.core_type<tc>, window_params = [{transform_indices = @transform_0, window_bounds = array<i64: 1, 128>}, {transform_indices = @transform_1, window_bounds = array<i64: 128, 128>}, {pipeline_mode = #tpu.pipeline_mode<synchronous>, transform_indices = @transform_2, window_bounds = array<i64: 128, 128>}, {pipeline_mode = #tpu.pipeline_mode<synchronous>, transform_indices = @transform_3, window_bounds = array<i64: 1, 128>}, {pipeline_mode = #tpu.pipeline_mode<synchronous>, transform_indices = @transform_4, window_bounds = array<i64: 128, 128>}, {pipeline_mode = #tpu.pipeline_mode<synchronous>, transform_indices = @transform_5, window_bounds = array<i64: 1, 128>}, {pipeline_mode = #tpu.pipeline_mode<synchronous>, transform_indices = @transform_6, window_bounds = array<i64: 8, 128>}]} {
    %c0_i32 = arith.constant 0 : i32
    %0 = arith.cmpi eq, %arg0, %c0_i32 : i32
    %1 = arith.extui %0 : i1 to i32
    %c0_i32_0 = arith.constant 0 : i32
    %2 = arith.cmpi ne, %1, %c0_i32_0 : i32
    scf.if %2 {
      %cst_10 = arith.constant 0.000000e+00 : f32
      %17 = vector.broadcast %cst_10 : f32 to vector<8x128xf32>
      %c0_11 = arith.constant 0 : index
      %c0_12 = arith.constant 0 : index
      %18 = vector.load %arg8[%c0_11, %c0_12] : memref<8x128xf32, #tpu.memory_space<vmem>>, vector<8x128xf32>
      tpu.vector_store %arg8[%c0_11, %c0_12], %17 {strides = array<i32>} : memref<8x128xf32, #tpu.memory_space<vmem>>, vector<8x128xf32>,
    } else {
    }
    %c0 = arith.constant 0 : index
    %c0_1 = arith.constant 0 : index
    %3 = vector.load %arg1[%c0, %c0_1] : memref<1x128xi32, #tpu.memory_space<vmem>>, vector<1x128xi32>
    %4 = tpu.iota {dimensions = array<i32: 0>} : vector<8x128xi32>
    %5 = vector.broadcast %3 : vector<1x128xi32> to vector<8x128xi32>
    %6 = arith.cmpi eq, %4, %5 : vector<8x128xi32>
    %7 = arith.extui %6 : vector<8x128xi1> to vector<8x128xi32>
    %8 = arith.sitofp %7 : vector<8x128xi32> to vector<8x128xf32>
    %c0_2 = arith.constant 0 : index
    %c0_3 = arith.constant 0 : index
    %9 = vector.load %arg8[%c0_2, %c0_3] : memref<8x128xf32, #tpu.memory_space<vmem>>, vector<8x128xf32>
    %c0_4 = arith.constant 0 : index
    %c0_5 = arith.constant 0 : index
    %10 = vector.load %arg2[%c0_4, %c0_5] : memref<128x128xf32, #tpu.memory_space<vmem>>, vector<128x128xf32>
    %cst = arith.constant dense<0.000000e+00> : vector<8x128xf32>
    %11 = tpu.matmul %8, %10, %cst {dimension_numbers = #tpu.dot_dimension_numbers<[1], [0], [0], [1], [0, 0, 1, 1], [], []>} : vector<8x128xf32>, vector<128x128xf32>, vector<8x128xf32> -> vector<8x128xf32>
    %12 = arith.addf %9, %11 : vector<8x128xf32>
    %c0_6 = arith.constant 0 : index
    %c0_7 = arith.constant 0 : index
    %13 = vector.load %arg8[%c0_6, %c0_7] : memref<8x128xf32, #tpu.memory_space<vmem>>, vector<8x128xf32>
    tpu.vector_store %arg8[%c0_6, %c0_7], %12 {strides = array<i32>} : memref<8x128xf32, #tpu.memory_space<vmem>>, vector<8x128xf32>,
    %c0_i32_8 = arith.constant 0 : i32
    %14 = arith.cmpi eq, %arg0, %c0_i32_8 : i32
    %15 = arith.extui %14 : i1 to i32
    %c0_i32_9 = arith.constant 0 : i32
    %16 = arith.cmpi ne, %15, %c0_i32_9 : i32
    scf.if %16 {
      %c0_10 = arith.constant 0 : index
      %c0_11 = arith.constant 0 : index
      %17 = vector.load %arg8[%c0_10, %c0_11] : memref<8x128xf32, #tpu.memory_space<vmem>>, vector<8x128xf32>
      %c0_12 = arith.constant 0 : index
      %c0_13 = arith.constant 0 : index
      %18 = vector.load %arg3[%c0_12, %c0_13] : memref<128x128xf32, #tpu.memory_space<vmem>>, vector<128x128xf32>
      %cst_14 = arith.constant dense<0.000000e+00> : vector<8x128xf32>
      %19 = tpu.matmul %17, %18, %cst_14 {dimension_numbers = #tpu.dot_dimension_numbers<[1], [0], [0], [1], [0, 0, 1, 1], [], []>} : vector<8x128xf32>, vector<128x128xf32>, vector<8x128xf32> -> vector<8x128xf32>
      %c0_15 = arith.constant 0 : index
      %c0_16 = arith.constant 0 : index
      %20 = vector.load %arg4[%c0_15, %c0_16] : memref<1x128xf32, #tpu.memory_space<vmem>>, vector<1x128xf32>
      %21 = vector.broadcast %20 : vector<1x128xf32> to vector<8x128xf32>
      %22 = arith.addf %19, %21 : vector<8x128xf32>
      %cst_17 = arith.constant 0.000000e+00 : f32
      %23 = vector.broadcast %cst_17 : f32 to vector<8x128xf32>
      %24 = arith.maximumf %22, %23 : vector<8x128xf32>
      %c0_18 = arith.constant 0 : index
      %c0_19 = arith.constant 0 : index
      %25 = vector.load %arg5[%c0_18, %c0_19] : memref<128x128xf32, #tpu.memory_space<vmem>>, vector<128x128xf32>
      %cst_20 = arith.constant dense<0.000000e+00> : vector<8x128xf32>
      %26 = tpu.matmul %24, %25, %cst_20 {dimension_numbers = #tpu.dot_dimension_numbers<[1], [0], [0], [1], [0, 0, 1, 1], [], []>} : vector<8x128xf32>, vector<128x128xf32>, vector<8x128xf32> -> vector<8x128xf32>
      %c0_21 = arith.constant 0 : index
      %c0_22 = arith.constant 0 : index
      %27 = vector.load %arg6[%c0_21, %c0_22] : memref<1x128xf32, #tpu.memory_space<vmem>>, vector<1x128xf32>
      %28 = vector.broadcast %27 : vector<1x128xf32> to vector<8x128xf32>
      %29 = arith.addf %26, %28 : vector<8x128xf32>
      %c0_23 = arith.constant 0 : index
      %c0_24 = arith.constant 0 : index
      %30 = vector.load %arg7[%c0_23, %c0_24] : memref<8x128xf32, #tpu.memory_space<vmem>>, vector<8x128xf32>
      tpu.vector_store %arg7[%c0_23, %c0_24], %29 {strides = array<i32>} : memref<8x128xf32, #tpu.memory_space<vmem>>, vector<8x128xf32>,
    } else {
    }
    return
  }
  func.func @transform_0(%arg0: i32) -> (i32, i32) {
    %c0_i32 = arith.constant 0 : i32
    %c0_i32_0 = arith.constant 0 : i32
    return %c0_i32, %arg0 : i32, i32
  }
  func.func @transform_1(%arg0: i32) -> (i32, i32) {
    %c0_i32 = arith.constant 0 : i32
    %c0_i32_0 = arith.constant 0 : i32
    return %arg0, %c0_i32 : i32, i32
  }
  func.func @transform_2(%arg0: i32) -> (i32, i32) {
    %c0_i32 = arith.constant 0 : i32
    %c0_i32_0 = arith.constant 0 : i32
    %c0_i32_1 = arith.constant 0 : i32
    return %c0_i32, %c0_i32_0 : i32, i32
  }
  func.func @transform_3(%arg0: i32) -> (i32, i32) {
    %c0_i32 = arith.constant 0 : i32
    %c0_i32_0 = arith.constant 0 : i32
    %c0_i32_1 = arith.constant 0 : i32
    return %c0_i32, %c0_i32_0 : i32, i32
  }
  func.func @transform_4(%arg0: i32) -> (i32, i32) {
    %c0_i32 = arith.constant 0 : i32
    %c0_i32_0 = arith.constant 0 : i32
    %c0_i32_1 = arith.constant 0 : i32
    return %c0_i32, %c0_i32_0 : i32, i32
  }
  func.func @transform_5(%arg0: i32) -> (i32, i32) {
    %c0_i32 = arith.constant 0 : i32
    %c0_i32_0 = arith.constant 0 : i32
    %c0_i32_1 = arith.constant 0 : i32
    return %c0_i32, %c0_i32_0 : i32, i32
  }
  func.func @transform_6(%arg0: i32) -> (i32, i32) {
    %c0_i32 = arith.constant 0 : i32
    %c0_i32_0 = arith.constant 0 : i32
    %c0_i32_1 = arith.constant 0 : i32
    return %c0_i32, %c0_i32_0 : i32, i32
  }
}

</mosaic_0001>

<llo_original>
// kernel: gin_agg.1
$region0: #{gin_agg.1}
  #allocation0 [shape = 'u32[]', space=smem, size = 0x4, offset = 0x4, fixed_abs, tag = 'smem constant byte address 0x4 - core index']
  #allocation1 [shape = 'u32[144,128]{1,0:T(1,128)}', space=vmem, size = 0x12000, scoped, tag = 'internal scratch']
  #allocation2 [shape = 'f32[8,128]{1,0:T(8,128)}', space=vmem, size = 0x1000, scoped, tag = 'scratch operand']
  %s0 = inlined_call_operand.vmem [shape: s32[1,128], index: 0, kind: input, shape index: {}]
  %s1 = inlined_call_operand.vmem [shape: f32[128,128], index: 1, kind: input, shape index: {}]
  %s2 = inlined_call_operand.vmem [shape: f32[128,128], index: 2, kind: input, shape index: {}]
  %s3 = inlined_call_operand.vmem [shape: f32[1,128], index: 3, kind: input, shape index: {}]
  %s4 = inlined_call_operand.vmem [shape: f32[128,128], index: 4, kind: input, shape index: {}]
  %s5 = inlined_call_operand.vmem [shape: f32[1,128], index: 5, kind: input, shape index: {}]
  %s6 = inlined_call_operand.hbm [shape: f32[8,128], index: 6, kind: output, shape index: {}]
  %s7 = sld [smem:[#allocation0]]
  $region42: #{gin_agg.1} parent=0
    _
  %s9 = ssub.s32 1, %s7
  %s10 = scalar_select 0, %s9, %s7
  $region1: #{gin_agg.1} parent=0
    #allocation3 [shape = 'u8[4096]{0}', space=vmem, size = 0x1000, scoped, tag = 'output window, operand 0, single buffered']
    #allocation4 [shape = 's32[1]{0}', space=sflag, size = 0x4, scoped, tag = 'scoped memory for gin_agg.1']
    %11 = vsyncpa [#allocation4], 0
    // Predicated region
    $region2: #{gin_agg.1} parent=1 // pred_check
      _
    $region3: #{gin_agg.1} parent=1 // pred_check_branch
      %13 = sbr.rel (0) target = $region5
    $region4: #{gin_agg.1} parent=1 // pred_region
      _
    $region5: #{gin_agg.1} parent=1 // pred_fallthru
      _
    // Predicated region
    $region6: #{gin_agg.1} parent=1 // pred_check
      _
    $region7: #{gin_agg.1} parent=1 // pred_check_branch
      %15 = sbr.rel (0) target = $region9
    $region8: #{gin_agg.1} parent=1 // pred_region
      _
    $region9: #{gin_agg.1} parent=1 // pred_fallthru
      _
    // Predicated region
    $region10: #{gin_agg.1} parent=1 // pred_check
      _
    $region11: #{gin_agg.1} parent=1 // pred_check_branch
      %17 = sbr.rel (0) target = $region13
    $region12: #{gin_agg.1} parent=1 // pred_region
      _
    $region13: #{gin_agg.1} parent=1 // pred_fallthru
      _
    // Predicated region
    $region14: #{gin_agg.1} parent=1 // pred_check
      _
    $region15: #{gin_agg.1} parent=1 // pred_check_branch
      %19 = sbr.rel (0) target = $region17
    $region16: #{gin_agg.1} parent=1 // pred_region
      _
    $region17: #{gin_agg.1} parent=1 // pred_fallthru
      _
    // Predicated region
    $region18: #{gin_agg.1} parent=1 // pred_check
      _
    $region19: #{gin_agg.1} parent=1 // pred_check_branch
      %21 = sbr.rel (0) target = $region21
    $region20: #{gin_agg.1} parent=1 // pred_region
      _
    $region21: #{gin_agg.1} parent=1 // pred_fallthru
      _
    // Predicated region
    $region22: #{gin_agg.1} parent=1 // pred_check
      _
    $region23: #{gin_agg.1} parent=1 // pred_check_branch
      %23 = sbr.rel (0) target = $region25
    $region24: #{gin_agg.1} parent=1 // pred_region
      _
    $region25: #{gin_agg.1} parent=1 // pred_fallthru
      _
    %p24 = scmp.eq.s32.totalorder 0, 0
    // Predicated region
    $region26: #{gin_agg.1} parent=1 // pred_check
      %p25 = pneg %p24
    $region27: #{gin_agg.1} parent=1 // pred_check_branch
      %27 = sbr.rel (%p25) target = $region29
    $region28: #{gin_agg.1} parent=1 // pred_region
      %28 = vst [vmem:[#allocation2] sm:$0xff] 0.0
    $region29: #{gin_agg.1} parent=1 // pred_fallthru
      _
    %v29 = vld [vmem:[%s0] sm:$0x1]
    %v30 = vlaneseq
    %v31 = vshrl.u32 %v30, 7
    %v32 = vlaneseq
    %v33 = vshrl.u32 %v32, 7
    %v34 = vsub.s32 0, %v33
    %v35 = vrot.slane %v29, %v34
    %vm36 = vcmp.eq.s32.totalorder %v31, %v35
    %v37 = vsel %vm36, 1, 0
    %v38 = vcvt.s32.f32 %v37
    %v39 = vld [vmem:[#allocation2] sm:$0xff]
    %v40 = vld [vmem:[%s1] sm:$0xff]
    %v41 = vld [vmem:[%s1 + $0x8] sm:$0xff]
    %v42 = vld [vmem:[%s1 + $0x10] sm:$0xff]
    %v43 = vld [vmem:[%s1 + $0x18] sm:$0xff]
    %v44 = vld [vmem:[%s1 + $0x20] sm:$0xff]
    %v45 = vld [vmem:[%s1 + $0x28] sm:$0xff]
    %v46 = vld [vmem:[%s1 + $0x30] sm:$0xff]
    %v47 = vld [vmem:[%s1 + $0x38] sm:$0xff]
    %v48 = vld [vmem:[%s1 + $0x40] sm:$0xff]
    %v49 = vld [vmem:[%s1 + $0x48] sm:$0xff]
    %v50 = vld [vmem:[%s1 + $0x50] sm:$0xff]
    %v51 = vld [vmem:[%s1 + $0x58] sm:$0xff]
    %v52 = vld [vmem:[%s1 + $0x60] sm:$0xff]
    %v53 = vld [vmem:[%s1 + $0x68] sm:$0xff]
    %v54 = vld [vmem:[%s1 + $0x70] sm:$0xff]
    %v55 = vld [vmem:[%s1 + $0x78] sm:$0xff]
    %56 = vmatprep.subr.mxu0 0.0
    %57 = vmatpush1.msra.mxu0 %v55
    %58 = vmatprep.subr.mxu0 0.0
    %59 = vmatpush1.msra.mxu0 %v54
    %60 = vmatprep.subr.mxu0 0.0
    %61 = vmatpush1.msra.mxu0 %v53
    %62 = vmatprep.subr.mxu0 0.0
    %63 = vmatpush1.msra.mxu0 %v52
    %64 = vmatprep.subr.mxu0 0.0
    %65 = vmatpush1.msra.mxu0 %v51
    %66 = vmatprep.subr.mxu0 0.0
    %67 = vmatpush1.msra.mxu0 %v50
    %68 = vmatprep.subr.mxu0 0.0
    %69 = vmatpush1.msra.mxu0 %v49
    %70 = vmatprep.subr.mxu0 0.0
    %71 = vmatpush1.msra.mxu0 %v48
    %72 = vmatprep.subr.mxu0 0.0
    %73 = vmatpush1.msra.mxu0 %v47
    %74 = vmatprep.subr.mxu0 0.0
    %75 = vmatpush1.msra.mxu0 %v46
    %76 = vmatprep.subr.mxu0 0.0
    %77 = vmatpush1.msra.mxu0 %v45
    %78 = vmatprep.subr.mxu0 0.0
    %79 = vmatpush1.msra.mxu0 %v44
    %80 = vmatprep.subr.mxu0 0.0
    %81 = vmatpush1.msra.mxu0 %v43
    %82 = vmatprep.subr.mxu0 0.0
    %83 = vmatpush1.msra.mxu0 %v42
    %84 = vmatprep.subr.mxu0 0.0
    %85 = vmatpush1.msra.mxu0 %v41
    %86 = vmatprep.subr.mxu0 0.0
    %87 = vmatpush1.msra.mxu0 %v40
    %88 = vmatprep.subr.mxu0 0.0
    %89 = vmatpush2.msra.mxu0 0.0
    %90 = vmatprep.subr.mxu0 0.0
    %91 = vmatpush2.msra.mxu0 0.0
    %92 = vmatprep.subr.mxu0 0.0
    %93 = vmatpush2.msra.mxu0 0.0
    %94 = vmatprep.subr.mxu0 0.0
    %95 = vmatpush2.msra.mxu0 0.0
    %96 = vmatprep.subr.mxu0 0.0
    %97 = vmatpush2.msra.mxu0 0.0
    %98 = vmatprep.subr.mxu0 0.0
    %99 = vmatpush2.msra.mxu0 0.0
    %100 = vmatprep.subr.mxu0 0.0
    %101 = vmatpush2.msra.mxu0 0.0
    %102 = vmatprep.subr.mxu0 0.0
    %103 = vmatpush2.msra.mxu0 0.0
    %104 = vmatprep.subr.mxu0 0.0
    %105 = vmatpush2.msra.mxu0 0.0
    %106 = vmatprep.subr.mxu0 0.0
    %107 = vmatpush2.msra.mxu0 0.0
    %108 = vmatprep.subr.mxu0 0.0
    %109 = vmatpush2.msra.mxu0 0.0
    %110 = vmatprep.subr.mxu0 0.0
    %111 = vmatpush2.msra.mxu0 0.0
    %112 = vmatprep.subr.mxu0 0.0
    %113 = vmatpush2.msra.mxu0 0.0
    %114 = vmatprep.subr.mxu0 0.0
    %115 = vmatpush2.msra.mxu0 0.0
    %116 = vmatprep.subr.mxu0 0.0
    %117 = vmatpush2.msra.mxu0 0.0
    %118 = vmatprep.subr.mxu0 0.0
    %119 = vmatpush2.msra.mxu0 0.0
    %120 = vmatprep.mubr.f32.mxu0 0.0
    %121 = vmatmul.mubr.f32.gmra.mxu0 %v38
    %v122 = vpop.f32.mrf.mxu0
    %v123 = vadd.f32 0.0, %v122
    %v124 = vpop.f32.mrf.mxu0
    %125 = vdwg.mxu0
    %v126 = vadd.f32 %v39, %v123
    %127 = vst [vmem:[#allocation2] sm:$0xff] %v126
    // Predicated region
    $region30: #{gin_agg.1} parent=1 // pred_check
      %p128 = pneg %p24
    $region31: #{gin_agg.1} parent=1 // pred_check_branch
      %130 = sbr.rel (%p128) target = $region33
    $region32: #{gin_agg.1} parent=1 // pred_region
      %v131 = vld [vmem:[#allocation2] sm:$0xff]
      %v132 = vld [vmem:[%s2] sm:$0xff]
      %v133 = vld [vmem:[%s2 + $0x8] sm:$0xff]
      %v134 = vld [vmem:[%s2 + $0x10] sm:$0xff]
      %v135 = vld [vmem:[%s2 + $0x18] sm:$0xff]
      %v136 = vld [vmem:[%s2 + $0x20] sm:$0xff]
      %v137 = vld [vmem:[%s2 + $0x28] sm:$0xff]
      %v138 = vld [vmem:[%s2 + $0x30] sm:$0xff]
      %v139 = vld [vmem:[%s2 + $0x38] sm:$0xff]
      %v140 = vld [vmem:[%s2 + $0x40] sm:$0xff]
      %v141 = vld [vmem:[%s2 + $0x48] sm:$0xff]
      %v142 = vld [vmem:[%s2 + $0x50] sm:$0xff]
      %v143 = vld [vmem:[%s2 + $0x58] sm:$0xff]
      %v144 = vld [vmem:[%s2 + $0x60] sm:$0xff]
      %v145 = vld [vmem:[%s2 + $0x68] sm:$0xff]
      %v146 = vld [vmem:[%s2 + $0x70] sm:$0xff]
      %v147 = vld [vmem:[%s2 + $0x78] sm:$0xff]
      %v148 = vld [vmem:[%s3] sm:$0x1]
      %v150 = vlaneseq
      %v151 = vshrl.u32 %v150, 7
      %v152 = vsub.s32 0, %v151
      %v153 = vrot.slane %v148, %v152
      %155 = vmatprep.subr.mxu0 0.0
      %156 = vmatpush1.msra.mxu0 %v147
      %157 = vmatprep.subr.mxu0 0.0
      %158 = vmatpush1.msra.mxu0 %v146
      %159 = vmatprep.subr.mxu0 0.0
      %160 = vmatpush1.msra.mxu0 %v145
      %161 = vmatprep.subr.mxu0 0.0
      %162 = vmatpush1.msra.mxu0 %v144
      %163 = vmatprep.subr.mxu0 0.0
      %164 = vmatpush1.msra.mxu0 %v143
      %165 = vmatprep.subr.mxu0 0.0
      %166 = vmatpush1.msra.mxu0 %v142
      %167 = vmatprep.subr.mxu0 0.0
      %168 = vmatpush1.msra.mxu0 %v141
      %169 = vmatprep.subr.mxu0 0.0
      %170 = vmatpush1.msra.mxu0 %v140
      %171 = vmatprep.subr.mxu0 0.0
      %172 = vmatpush1.msra.mxu0 %v139
      %173 = vmatprep.subr.mxu0 0.0
      %174 = vmatpush1.msra.mxu0 %v138
      %175 = vmatprep.subr.mxu0 0.0
      %176 = vmatpush1.msra.mxu0 %v137
      %177 = vmatprep.subr.mxu0 0.0
      %178 = vmatpush1.msra.mxu0 %v136
      %179 = vmatprep.subr.mxu0 0.0
      %180 = vmatpush1.msra.mxu0 %v135
      %181 = vmatprep.subr.mxu0 0.0
      %182 = vmatpush1.msra.mxu0 %v134
      %183 = vmatprep.subr.mxu0 0.0
      %184 = vmatpush1.msra.mxu0 %v133
      %185 = vmatprep.subr.mxu0 0.0
      %186 = vmatpush1.msra.mxu0 %v132
      %187 = vmatprep.subr.mxu0 0.0
      %188 = vmatpush2.msra.mxu0 0.0
      %189 = vmatprep.subr.mxu0 0.0
      %190 = vmatpush2.msra.mxu0 0.0
      %191 = vmatprep.subr.mxu0 0.0
      %192 = vmatpush2.msra.mxu0 0.0
      %193 = vmatprep.subr.mxu0 0.0
      %194 = vmatpush2.msra.mxu0 0.0
      %195 = vmatprep.subr.mxu0 0.0
      %196 = vmatpush2.msra.mxu0 0.0
      %197 = vmatprep.subr.mxu0 0.0
      %198 = vmatpush2.msra.mxu0 0.0
      %199 = vmatprep.subr.mxu0 0.0
      %200 = vmatpush2.msra.mxu0 0.0
      %201 = vmatprep.subr.mxu0 0.0
      %202 = vmatpush2.msra.mxu0 0.0
      %203 = vmatprep.subr.mxu0 0.0
      %204 = vmatpush2.msra.mxu0 0.0
      %205 = vmatprep.subr.mxu0 0.0
      %206 = vmatpush2.msra.mxu0 0.0
      %207 = vmatprep.subr.mxu0 0.0
      %208 = vmatpush2.msra.mxu0 0.0
      %209 = vmatprep.subr.mxu0 0.0
      %210 = vmatpush2.msra.mxu0 0.0
      %211 = vmatprep.subr.mxu0 0.0
      %212 = vmatpush2.msra.mxu0 0.0
      %213 = vmatprep.subr.mxu0 0.0
      %214 = vmatpush2.msra.mxu0 0.0
      %215 = vmatprep.subr.mxu0 0.0
      %216 = vmatpush2.msra.mxu0 0.0
      %217 = vmatprep.subr.mxu0 0.0
      %218 = vmatpush2.msra.mxu0 0.0
      %219 = vmatprep.mubr.f32.mxu0 0.0
      %220 = vmatmul.mubr.f32.gmra.mxu0 %v131
      %v221 = vpop.f32.mrf.mxu0
      %v222 = vadd.f32 %v153, %v221
      %v223 = vpop.f32.mrf.mxu0
      %224 = vdwg.mxu0
      %v225 = vmax.f32 %v222, 0.0
      %v226 = vld [vmem:[%s4] sm:$0xff]
      %v227 = vld [vmem:[%s4 + $0x8] sm:$0xff]
      %v228 = vld [vmem:[%s4 + $0x10] sm:$0xff]
      %v229 = vld [vmem:[%s4 + $0x18] sm:$0xff]
      %v230 = vld [vmem:[%s4 + $0x20] sm:$0xff]
      %v231 = vld [vmem:[%s4 + $0x28] sm:$0xff]
      %v232 = vld [vmem:[%s4 + $0x30] sm:$0xff]
      %v233 = vld [vmem:[%s4 + $0x38] sm:$0xff]
      %v234 = vld [vmem:[%s4 + $0x40] sm:$0xff]
      %v235 = vld [vmem:[%s4 + $0x48] sm:$0xff]
      %v236 = vld [vmem:[%s4 + $0x50] sm:$0xff]
      %v237 = vld [vmem:[%s4 + $0x58] sm:$0xff]
      %v238 = vld [vmem:[%s4 + $0x60] sm:$0xff]
      %v239 = vld [vmem:[%s4 + $0x68] sm:$0xff]
      %v240 = vld [vmem:[%s4 + $0x70] sm:$0xff]
      %v241 = vld [vmem:[%s4 + $0x78] sm:$0xff]
      %v242 = vld [vmem:[%s5] sm:$0x1]
      %v244 = vlaneseq
      %v245 = vshrl.u32 %v244, 7
      %v246 = vsub.s32 0, %v245
      %v247 = vrot.slane %v242, %v246
      %249 = vmatprep.subr.mxu0 0.0
      %250 = vmatpush1.msra.mxu0 %v241
      %251 = vmatprep.subr.mxu0 0.0
      %252 = vmatpush1.msra.mxu0 %v240
      %253 = vmatprep.subr.mxu0 0.0
      %254 = vmatpush1.msra.mxu0 %v239
      %255 = vmatprep.subr.mxu0 0.0
      %256 = vmatpush1.msra.mxu0 %v238
      %257 = vmatprep.subr.mxu0 0.0
      %258 = vmatpush1.msra.mxu0 %v237
      %259 = vmatprep.subr.mxu0 0.0
      %260 = vmatpush1.msra.mxu0 %v236
      %261 = vmatprep.subr.mxu0 0.0
      %262 = vmatpush1.msra.mxu0 %v235
      %263 = vmatprep.subr.mxu0 0.0
      %264 = vmatpush1.msra.mxu0 %v234
      %265 = vmatprep.subr.mxu0 0.0
      %266 = vmatpush1.msra.mxu0 %v233
      %267 = vmatprep.subr.mxu0 0.0
      %268 = vmatpush1.msra.mxu0 %v232
      %269 = vmatprep.subr.mxu0 0.0
      %270 = vmatpush1.msra.mxu0 %v231
      %271 = vmatprep.subr.mxu0 0.0
      %272 = vmatpush1.msra.mxu0 %v230
      %273 = vmatprep.subr.mxu0 0.0
      %274 = vmatpush1.msra.mxu0 %v229
      %275 = vmatprep.subr.mxu0 0.0
      %276 = vmatpush1.msra.mxu0 %v228
      %277 = vmatprep.subr.mxu0 0.0
      %278 = vmatpush1.msra.mxu0 %v227
      %279 = vmatprep.subr.mxu0 0.0
      %280 = vmatpush1.msra.mxu0 %v226
      %281 = vmatprep.subr.mxu0 0.0
      %282 = vmatpush2.msra.mxu0 0.0
      %283 = vmatprep.subr.mxu0 0.0
      %284 = vmatpush2.msra.mxu0 0.0
      %285 = vmatprep.subr.mxu0 0.0
      %286 = vmatpush2.msra.mxu0 0.0
      %287 = vmatprep.subr.mxu0 0.0
      %288 = vmatpush2.msra.mxu0 0.0
      %289 = vmatprep.subr.mxu0 0.0
      %290 = vmatpush2.msra.mxu0 0.0
      %291 = vmatprep.subr.mxu0 0.0
      %292 = vmatpush2.msra.mxu0 0.0
      %293 = vmatprep.subr.mxu0 0.0
      %294 = vmatpush2.msra.mxu0 0.0
      %295 = vmatprep.subr.mxu0 0.0
      %296 = vmatpush2.msra.mxu0 0.0
      %297 = vmatprep.subr.mxu0 0.0
      %298 = vmatpush2.msra.mxu0 0.0
      %299 = vmatprep.subr.mxu0 0.0
      %300 = vmatpush2.msra.mxu0 0.0
      %301 = vmatprep.subr.mxu0 0.0
      %302 = vmatpush2.msra.mxu0 0.0
      %303 = vmatprep.subr.mxu0 0.0
      %304 = vmatpush2.msra.mxu0 0.0
      %305 = vmatprep.subr.mxu0 0.0
      %306 = vmatpush2.msra.mxu0 0.0
      %307 = vmatprep.subr.mxu0 0.0
      %308 = vmatpush2.msra.mxu0 0.0
      %309 = vmatprep.subr.mxu0 0.0
      %310 = vmatpush2.msra.mxu0 0.0
      %311 = vmatprep.subr.mxu0 0.0
      %312 = vmatpush2.msra.mxu0 0.0
      %313 = vmatprep.mubr.f32.mxu0 0.0
      %314 = vmatmul.mubr.f32.gmra.mxu0 %v225
      %v315 = vpop.f32.mrf.mxu0
      %v316 = vadd.f32 %v247, %v315
      %v317 = vpop.f32.mrf.mxu0
      %318 = vdwg.mxu0
      %319 = vst [vmem:[#allocation3] sm:$0xff] %v316
    $region33: #{gin_agg.1} parent=1 // pred_fallthru
      _
    // Predicated region
    $region34: #{gin_agg.1} parent=1 // pred_check
      _
    $region35: #{gin_agg.1} parent=1 // pred_check_branch
      %321 = sbr.rel (0) target = $region37
    $region36: #{gin_agg.1} parent=1 // pred_region
      %s323 = ssub.s32 128, 128
      %324 = vsyncadd [#allocation4], %s323
      %s326 = sshll.u32 [#allocation3], 4
      %s327 = int_to_ptr.vmem [resolvable:$true] %s326
      %329 = dma.vmem_to_hbm [thread:$0]  %s327, 128, %s6, [#allocation4]
    $region37: #{gin_agg.1} parent=1 // pred_fallthru
      _
    // Predicated region
    $region38: #{gin_agg.1} parent=1 // pred_check
      _
    $region39: #{gin_agg.1} parent=1 // pred_check_branch
      %331 = sbr.rel (0) target = $region41
    $region40: #{gin_agg.1} parent=1 // pred_region
      %332 = dma.done [#allocation4], 128
    $region41: #{gin_agg.1} parent=1 // pred_fallthru
      _
    %333 = vsyncpa [#allocation4], 1

</llo_original>
